<compile_context>
chip_gen: v7x
topology: tpu7x:2x2x1
jax: 0.10.0
libtpu: 0.0.40
codegen_flags: <defaults>
</compile_context>

<pallas_src>
import math
import functools

import jax
import jax.numpy as jnp
from jax import lax
from jax.experimental import pallas as pl
from jax.experimental.pallas import tpu as pltpu


# ----------------------------------------------------------------------------
# Fused attention kernel: one grid step = one (batch, q-tile, head) triple.
# ----------------------------------------------------------------------------
def _fused_attention_kernel(q_in_ref, k_in_ref, v_in_ref,
                            wq_ref, bq_ref, wk_ref, bk_ref, wv_ref, bv_ref,
                            wo_ref, bo_ref,
                            out_ref, p_ref,
                            acc_ref):
    # q_in_ref : (tq, Nq) bf16   raw query rows (this batch / q-tile)
    # k_in_ref : (Sk, Nk) bf16   raw key rows   (this batch)
    # v_in_ref : (Sk, Nv) bf16   raw value rows (this batch)
    # wq_ref   : (Nq, dk) bf16   this head's q projection (1/sqrt(dk) folded in)
    # bq_ref   : (1, dk)  f32    (wk/bk, wv/bv analogous)
    # wo_ref   : (dk, A)  bf16   this head's rows of the output projection
    # bo_ref   : (1, A)   f32
    # out_ref  : (tq, A)  f32    final output block (resident across heads)
    # p_ref    : (tq, Sk) f32    this head's attention weights
    # acc_ref  : (tq, A)  f32    VMEM accumulator for the fused out-projection
    h = pl.program_id(2)

    # ---- per-head q/k/v projections (bf16 on the MXU, f32 accumulation) ----
    q_h = jnp.dot(q_in_ref[...], wq_ref[...],
                  preferred_element_type=jnp.float32) + bq_ref[...]   # (tq, dk)
    k_h = jnp.dot(k_in_ref[...], wk_ref[...],
                  preferred_element_type=jnp.float32) + bk_ref[...]   # (Sk, dk)
    v_h = jnp.dot(v_in_ref[...], wv_ref[...],
                  preferred_element_type=jnp.float32) + bv_ref[...]   # (Sk, dk)

    # ---- scores = q_h @ k_h^T : contract last dims (no materialized .T) ----
    scores = lax.dot_general(q_h.astype(jnp.bfloat16), k_h.astype(jnp.bfloat16),
                             (((1,), (1,)), ((), ())),
                             preferred_element_type=jnp.float32)      # (tq, Sk)

    # ---- softmax over Sk in f32 (exact reciprocal: the attention weights are
    #      a user-visible output, rows must sum to 1) ------------------------
    m = jnp.max(scores, axis=-1, keepdims=True)
    e = jnp.exp(scores - m)
    p = e / jnp.sum(e, axis=-1, keepdims=True)
    p_ref[...] = p        # single contiguous (tq, Sk) store per grid step

    # ---- context + fused output projection, accumulated across heads -------
    ctx = jnp.dot(p.astype(jnp.bfloat16), v_h.astype(jnp.bfloat16),
                  preferred_element_type=jnp.float32)                 # (tq, dk)

    @pl.when(h == 0)
    def _init():
        acc_ref[...] = jnp.broadcast_to(bo_ref[...], acc_ref.shape)

    acc_ref[...] += jnp.dot(ctx.astype(jnp.bfloat16), wo_ref[...],
                            preferred_element_type=jnp.float32)

    @pl.when(h == pl.num_programs(2) - 1)
    def _finalize():
        out_ref[...] = acc_ref[...]


# ----------------------------------------------------------------------------
# Wrapper: head-major weight prep + single pallas_call
# ----------------------------------------------------------------------------
def _pick_q_tile(sq, pref=256):
    if sq <= pref:
        return sq
    for t in (256, 128, 64, 32, 16, 8):
        if sq % t == 0:
            return t
    return sq


def _split_w(w, heads):
    """(K, A) -> (H, K, dk) head-major layout (done once on tiny weights)."""
    K, A = w.shape
    dk = A // heads
    return jnp.transpose(w.reshape(K, heads, dk), (1, 0, 2))


def _split_b(b, heads):
    """(A,) -> (H, 1, dk)."""
    A = b.shape[0]
    dk = A // heads
    return b.reshape(heads, 1, dk)


def attention_forward(params, query, key, value, heads):
    """query/key/value: (B, Sq, Nq) / (B, Sk, Nk) / (B, Sk, Nv), float32."""
    B, Sq, Nq = query.shape
    _, Sk, Nk = key.shape
    Nv = value.shape[2]
    w_q, b_q = params["q"]
    w_k, b_k = params["k"]
    w_v, b_v = params["v"]
    w_o, b_o = params["out"]
    A = w_q.shape[1]
    dk = A // heads
    scale = 1.0 / math.sqrt(dk)

    # Head-major weight layouts; fold the 1/sqrt(d_k) scale into q (exact).
    wq_h = _split_w(w_q * scale, heads).astype(jnp.bfloat16)     # (H, Nq, dk)
    bq_h = (_split_b(b_q, heads) * scale).astype(jnp.float32)    # (H, 1, dk)
    wk_h = _split_w(w_k, heads).astype(jnp.bfloat16)             # (H, Nk, dk)
    bk_h = _split_b(b_k, heads).astype(jnp.float32)
    wv_h = _split_w(w_v, heads).astype(jnp.bfloat16)             # (H, Nv, dk)
    bv_h = _split_b(b_v, heads).astype(jnp.float32)
    wo_h = w_o.reshape(heads, dk, A).astype(jnp.bfloat16)        # (H, dk, A)
    bo2 = b_o.reshape(1, A).astype(jnp.float32)

    q_bf = query.astype(jnp.bfloat16)
    k_bf = key.astype(jnp.bfloat16)
    v_bf = value.astype(jnp.bfloat16)

    tq = _pick_q_tile(Sq)
    grid = (B, Sq // tq, heads)

    flops = 2 * B * (Sq * Nq * A + Sk * Nk * A + Sk * Nv * A
                     + 2 * heads * Sq * Sk * dk + Sq * A * A)
    bytes_accessed = (2 * (B * Sq * Nq + B * Sk * (Nk + Nv))   # bf16 activations
                      + 4 * B * Sq * A                          # f32 output
                      + 4 * B * heads * Sq * Sk)                # f32 attn weights

    out, attn = pl.pallas_call(
        _fused_attention_kernel,
        out_shape=(
            jax.ShapeDtypeStruct((B, Sq, A), jnp.float32),
            jax.ShapeDtypeStruct((B, heads, Sq, Sk), jnp.float32),
        ),
        grid=grid,
        in_specs=[
            pl.BlockSpec((None, tq, Nq), lambda b, qi, h: (b, qi, 0)),
            pl.BlockSpec((None, Sk, Nk), lambda b, qi, h: (b, 0, 0)),
            pl.BlockSpec((None, Sk, Nv), lambda b, qi, h: (b, 0, 0)),
            pl.BlockSpec((None, Nq, dk), lambda b, qi, h: (h, 0, 0)),
            pl.BlockSpec((None, 1, dk), lambda b, qi, h: (h, 0, 0)),
            pl.BlockSpec((None, Nk, dk), lambda b, qi, h: (h, 0, 0)),
            pl.BlockSpec((None, 1, dk), lambda b, qi, h: (h, 0, 0)),
            pl.BlockSpec((None, Nv, dk), lambda b, qi, h: (h, 0, 0)),
            pl.BlockSpec((None, 1, dk), lambda b, qi, h: (h, 0, 0)),
            pl.BlockSpec((None, dk, A), lambda b, qi, h: (h, 0, 0)),
            pl.BlockSpec((1, A), lambda b, qi, h: (0, 0)),
        ],
        out_specs=(
            pl.BlockSpec((None, tq, A), lambda b, qi, h: (b, qi, 0)),
            pl.BlockSpec((None, None, tq, Sk), lambda b, qi, h: (b, h, qi, 0)),
        ),
        scratch_shapes=[pltpu.VMEM((tq, A), jnp.float32)],
        compiler_params=pltpu.CompilerParams(
            dimension_semantics=("parallel", "parallel", "arbitrary")),
        cost_estimate=pl.CostEstimate(
            flops=flops, transcendentals=B * heads * Sq * Sk,
            bytes_accessed=bytes_accessed),
    )(q_bf, k_bf, v_bf, wq_h, bq_h, wk_h, bk_h, wv_h, bv_h, wo_h, bo2)
    return out, attn


# ----------------------------------------------------------------------------
# Parameter init (matches nn.Linear uniform init, weights stored (in, out))
# ----------------------------------------------------------------------------
def init_attention_params(key, heads, attn_size, query_size, key_size, value_size):
    assert attn_size % heads == 0
    ks = jax.random.split(key, 8)
    params = {}
    sizes = {"q": query_size, "k": key_size, "v": value_size, "out": attn_size}
    for i, (name, in_f) in enumerate(sizes.items()):
        bound = 1.0 / math.sqrt(in_f)
        w = jax.random.uniform(ks[2 * i], (in_f, attn_size), jnp.float32, -bound, bound)
        b = jax.random.uniform(ks[2 * i + 1], (attn_size,), jnp.float32, -bound, bound)
        params[name] = (w, b)
    return params


# ----------------------------------------------------------------------------
# Pure-JAX f32 reference for correctness
# ----------------------------------------------------------------------------
def reference_forward(params, query, key, value, heads):
    attn_size = params["q"][0].shape[1]
    d_k = attn_size // heads
    B, Sq, _ = query.shape

    def project(x, name):
        w, b = params[name]
        y = x @ w + b
        return jnp.transpose(
            y.reshape(x.shape[0], x.shape[1], heads, d_k), (0, 2, 1, 3))

    q, k, v = project(query, "q"), project(key, "k"), project(value, "v")
    scores = jnp.einsum("bhqd,bhkd->bhqk", q, k) / math.sqrt(d_k)
    p = jax.nn.softmax(scores, axis=-1)
    ctx = jnp.einsum("bhqk,bhkd->bhqd", p, v)
    x = jnp.transpose(ctx, (0, 2, 1, 3)).reshape(B, Sq, attn_size)
    w_o, b_o = params["out"]
    return x @ w_o + b_o, p


# ----------------------------------------------------------------------------
if __name__ == "__main__":
    heads = 4
    attn_size = 32
    query_size, key_size, value_size = 16, 16, 16
    B, Sq, Sk = 2, 8, 8

    root = jax.random.PRNGKey(0)
    k_params, k_q, k_k, k_v = jax.random.split(root, 4)
    params = init_attention_params(
        k_params, heads, attn_size, query_size, key_size, value_size)

    query = jax.random.normal(k_q, (B, Sq, query_size), jnp.float32)
    key = jax.random.normal(k_k, (B, Sk, key_size), jnp.float32)
    value = jax.random.normal(k_v, (B, Sk, value_size), jnp.float32)

    fwd = jax.jit(functools.partial(attention_forward, heads=heads))
    out, attn = fwd(params, query, key, value)
    out = jax.block_until_ready(out)
    attn = jax.block_until_ready(attn)

    ref_out, ref_attn = reference_forward(params, query, key, value, heads)
    assert out.shape == (B, Sq, attn_size)
    assert attn.shape == (B, heads, Sq, Sk)
    # Tolerances account for bf16 matmul operands (f32 accumulation);
    # pure-f32 reference used as ground truth.
    assert jnp.allclose(out, ref_out, atol=5e-2, rtol=5e-2), \
        float(jnp.max(jnp.abs(out - ref_out)))
    assert jnp.allclose(attn, ref_attn, atol=2e-2, rtol=0.0), \
        float(jnp.max(jnp.abs(attn - ref_attn)))

    print("KERNEL_OK")
</pallas_src>

<mosaic_0001>
module attributes {stable_mosaic.version = 11 : i64} {
  func.func @_fused_attention_kernel(%arg0: i32, %arg1: i32, %arg2: i32, %arg3: memref<1x8x16xbf16, #tpu.memory_space<vmem>>, %arg4: memref<1x8x16xbf16, #tpu.memory_space<vmem>>, %arg5: memref<1x8x16xbf16, #tpu.memory_space<vmem>>, %arg6: memref<1x16x8xbf16, #tpu.memory_space<vmem>>, %arg7: memref<1x1x8xf32, #tpu.memory_space<vmem>>, %arg8: memref<1x16x8xbf16, #tpu.memory_space<vmem>>, %arg9: memref<1x1x8xf32, #tpu.memory_space<vmem>>, %arg10: memref<1x16x8xbf16, #tpu.memory_space<vmem>>, %arg11: memref<1x1x8xf32, #tpu.memory_space<vmem>>, %arg12: memref<1x8x32xbf16, #tpu.memory_space<vmem>>, %arg13: memref<1x32xf32, #tpu.memory_space<vmem>>, %arg14: memref<1x8x32xf32, #tpu.memory_space<vmem>>, %arg15: memref<1x1x8x8xf32, #tpu.memory_space<vmem>>, %arg16: memref<8x32xf32, #tpu.memory_space<vmem>>) attributes {dimension_semantics = [#tpu.dimension_semantics<parallel>, #tpu.dimension_semantics<parallel>, #tpu.dimension_semantics<arbitrary>], iteration_bounds = array<i64: 2, 1, 4>, scalar_prefetch = 0 : i64, scratch_operands = 1 : i64, tpu.core_type = #tpu.core_type<tc>, window_params = [{transform_indices = @transform_0, window_bounds = array<i64: 1, 8, 16>}, {transform_indices = @transform_1, window_bounds = array<i64: 1, 8, 16>}, {transform_indices = @transform_2, window_bounds = array<i64: 1, 8, 16>}, {transform_indices = @transform_3, window_bounds = array<i64: 1, 16, 8>}, {transform_indices = @transform_4, window_bounds = array<i64: 1, 1, 8>}, {transform_indices = @transform_5, window_bounds = array<i64: 1, 16, 8>}, {transform_indices = @transform_6, window_bounds = array<i64: 1, 1, 8>}, {transform_indices = @transform_7, window_bounds = array<i64: 1, 16, 8>}, {transform_indices = @transform_8, window_bounds = array<i64: 1, 1, 8>}, {transform_indices = @transform_9, window_bounds = array<i64: 1, 8, 32>}, {pipeline_mode = #tpu.pipeline_mode<synchronous>, transform_indices = @transform_10, window_bounds = array<i64: 1, 32>}, {transform_indices = @transform_11, window_bounds = array<i64: 1, 8, 32>}, {transform_indices = @transform_12, window_bounds = array<i64: 1, 1, 8, 8>}]} {
    %c0 = arith.constant 0 : index
    %c0_0 = arith.constant 0 : index
    %c0_1 = arith.constant 0 : index
    %0 = vector.load %arg3[%c0, %c0_0, %c0_1] : memref<1x8x16xbf16, #tpu.memory_space<vmem>>, vector<1x8x16xbf16>
    %1 = vector.shape_cast %0 : vector<1x8x16xbf16> to vector<8x16xbf16>
    %c0_2 = arith.constant 0 : index
    %c0_3 = arith.constant 0 : index
    %c0_4 = arith.constant 0 : index
    %2 = vector.load %arg6[%c0_2, %c0_3, %c0_4] : memref<1x16x8xbf16, #tpu.memory_space<vmem>>, vector<1x16x8xbf16>
    %3 = vector.shape_cast %2 : vector<1x16x8xbf16> to vector<16x8xbf16>
    %cst = arith.constant dense<0.000000e+00> : vector<8x8xf32>
    %4 = tpu.matmul %1, %3, %cst {dimension_numbers = #tpu.dot_dimension_numbers<[1], [0], [0], [1], [0, 0, 1, 1], [], []>} : vector<8x16xbf16>, vector<16x8xbf16>, vector<8x8xf32> -> vector<8x8xf32>
    %c0_5 = arith.constant 0 : index
    %c0_6 = arith.constant 0 : index
    %c0_7 = arith.constant 0 : index
    %5 = vector.load %arg7[%c0_5, %c0_6, %c0_7] : memref<1x1x8xf32, #tpu.memory_space<vmem>>, vector<1x1x8xf32>
    %6 = vector.shape_cast %5 : vector<1x1x8xf32> to vector<1x8xf32>
    %7 = vector.broadcast %6 : vector<1x8xf32> to vector<8x8xf32>
    %8 = arith.addf %4, %7 : vector<8x8xf32>
    %c0_8 = arith.constant 0 : index
    %c0_9 = arith.constant 0 : index
    %c0_10 = arith.constant 0 : index
    %9 = vector.load %arg4[%c0_8, %c0_9, %c0_10] : memref<1x8x16xbf16, #tpu.memory_space<vmem>>, vector<1x8x16xbf16>
    %10 = vector.shape_cast %9 : vector<1x8x16xbf16> to vector<8x16xbf16>
    %c0_11 = arith.constant 0 : index
    %c0_12 = arith.constant 0 : index
    %c0_13 = arith.constant 0 : index
    %11 = vector.load %arg8[%c0_11, %c0_12, %c0_13] : memref<1x16x8xbf16, #tpu.memory_space<vmem>>, vector<1x16x8xbf16>
    %12 = vector.shape_cast %11 : vector<1x16x8xbf16> to vector<16x8xbf16>
    %cst_14 = arith.constant dense<0.000000e+00> : vector<8x8xf32>
    %13 = tpu.matmul %10, %12, %cst_14 {dimension_numbers = #tpu.dot_dimension_numbers<[1], [0], [0], [1], [0, 0, 1, 1], [], []>} : vector<8x16xbf16>, vector<16x8xbf16>, vector<8x8xf32> -> vector<8x8xf32>
    %c0_15 = arith.constant 0 : index
    %c0_16 = arith.constant 0 : index
    %c0_17 = arith.constant 0 : index
    %14 = vector.load %arg9[%c0_15, %c0_16, %c0_17] : memref<1x1x8xf32, #tpu.memory_space<vmem>>, vector<1x1x8xf32>
    %15 = vector.shape_cast %14 : vector<1x1x8xf32> to vector<1x8xf32>
    %16 = vector.broadcast %15 : vector<1x8xf32> to vector<8x8xf32>
    %17 = arith.addf %13, %16 : vector<8x8xf32>
    %c0_18 = arith.constant 0 : index
    %c0_19 = arith.constant 0 : index
    %c0_20 = arith.constant 0 : index
    %18 = vector.load %arg5[%c0_18, %c0_19, %c0_20] : memref<1x8x16xbf16, #tpu.memory_space<vmem>>, vector<1x8x16xbf16>
    %19 = vector.shape_cast %18 : vector<1x8x16xbf16> to vector<8x16xbf16>
    %c0_21 = arith.constant 0 : index
    %c0_22 = arith.constant 0 : index
    %c0_23 = arith.constant 0 : index
    %20 = vector.load %arg10[%c0_21, %c0_22, %c0_23] : memref<1x16x8xbf16, #tpu.memory_space<vmem>>, vector<1x16x8xbf16>
    %21 = vector.shape_cast %20 : vector<1x16x8xbf16> to vector<16x8xbf16>
    %cst_24 = arith.constant dense<0.000000e+00> : vector<8x8xf32>
    %22 = tpu.matmul %19, %21, %cst_24 {dimension_numbers = #tpu.dot_dimension_numbers<[1], [0], [0], [1], [0, 0, 1, 1], [], []>} : vector<8x16xbf16>, vector<16x8xbf16>, vector<8x8xf32> -> vector<8x8xf32>
    %c0_25 = arith.constant 0 : index
    %c0_26 = arith.constant 0 : index
    %c0_27 = arith.constant 0 : index
    %23 = vector.load %arg11[%c0_25, %c0_26, %c0_27] : memref<1x1x8xf32, #tpu.memory_space<vmem>>, vector<1x1x8xf32>
    %24 = vector.shape_cast %23 : vector<1x1x8xf32> to vector<1x8xf32>
    %25 = vector.broadcast %24 : vector<1x8xf32> to vector<8x8xf32>
    %26 = arith.addf %22, %25 : vector<8x8xf32>
    %27 = arith.truncf %8 : vector<8x8xf32> to vector<8x8xbf16>
    %28 = arith.truncf %17 : vector<8x8xf32> to vector<8x8xbf16>
    %cst_28 = arith.constant dense<0.000000e+00> : vector<8x8xf32>
    %29 = tpu.matmul %27, %28, %cst_28 {dimension_numbers = #tpu.dot_dimension_numbers<[1], [1], [0], [0], [0, 0, 1, 0], [], []>} : vector<8x8xbf16>, vector<8x8xbf16>, vector<8x8xf32> -> vector<8x8xf32>
    %cst_29 = arith.constant dense<0xFF800000> : vector<8xf32>
    %30 = vector.multi_reduction <maximumf>, %29, %cst_29 [1] : vector<8x8xf32> to vector<8xf32>
    %31 = vector.shape_cast %30 : vector<8xf32> to vector<8x1xf32>
    %32 = vector.broadcast %31 : vector<8x1xf32> to vector<8x8xf32>
    %33 = arith.subf %29, %32 : vector<8x8xf32>
    %34 = math.exp %33 : vector<8x8xf32>
    %cst_30 = arith.constant dense<0.000000e+00> : vector<8xf32>
    %35 = vector.multi_reduction <add>, %34, %cst_30 [1] : vector<8x8xf32> to vector<8xf32>
    %36 = vector.shape_cast %35 : vector<8xf32> to vector<8x1xf32>
    %37 = vector.broadcast %36 : vector<8x1xf32> to vector<8x8xf32>
    %38 = arith.divf %34, %37 : vector<8x8xf32>
    %c0_31 = arith.constant 0 : index
    %c0_32 = arith.constant 0 : index
    %c0_33 = arith.constant 0 : index
    %c0_34 = arith.constant 0 : index
    %39 = vector.load %arg15[%c0_31, %c0_32, %c0_33, %c0_34] : memref<1x1x8x8xf32, #tpu.memory_space<vmem>>, vector<1x1x8x8xf32>
    %40 = vector.shape_cast %39 : vector<1x1x8x8xf32> to vector<8x8xf32>
    %41 = vector.shape_cast %38 : vector<8x8xf32> to vector<1x1x8x8xf32>
    tpu.vector_store %arg15[%c0_31, %c0_32, %c0_33, %c0_34], %41 {strides = array<i32>} : memref<1x1x8x8xf32, #tpu.memory_space<vmem>>, vector<1x1x8x8xf32>,
    %42 = arith.truncf %38 : vector<8x8xf32> to vector<8x8xbf16>
    %43 = arith.truncf %26 : vector<8x8xf32> to vector<8x8xbf16>
    %cst_35 = arith.constant dense<0.000000e+00> : vector<8x8xf32>
    %44 = tpu.matmul %42, %43, %cst_35 {dimension_numbers = #tpu.dot_dimension_numbers<[1], [0], [0], [1], [0, 0, 1, 1], [], []>} : vector<8x8xbf16>, vector<8x8xbf16>, vector<8x8xf32> -> vector<8x8xf32>
    %c0_i32 = arith.constant 0 : i32
    %45 = arith.cmpi eq, %arg2, %c0_i32 : i32
    %46 = arith.extui %45 : i1 to i32
    %c0_i32_36 = arith.constant 0 : i32
    %47 = arith.cmpi ne, %46, %c0_i32_36 : i32
    scf.if %47 {
      %c0_46 = arith.constant 0 : index
      %c0_47 = arith.constant 0 : index
      %58 = vector.load %arg13[%c0_46, %c0_47] : memref<1x32xf32, #tpu.memory_space<vmem>>, vector<1x32xf32>
      %59 = vector.shape_cast %58 : vector<1x32xf32> to vector<1x32xf32>
      %60 = vector.broadcast %59 : vector<1x32xf32> to vector<8x32xf32>
      %c0_48 = arith.constant 0 : index
      %c0_49 = arith.constant 0 : index
      %61 = vector.load %arg16[%c0_48, %c0_49] : memref<8x32xf32, #tpu.memory_space<vmem>>, vector<8x32xf32>
      tpu.vector_store %arg16[%c0_48, %c0_49], %60 {strides = array<i32>} : memref<8x32xf32, #tpu.memory_space<vmem>>, vector<8x32xf32>,
    } else {
    }
    %c0_37 = arith.constant 0 : index
    %c0_38 = arith.constant 0 : index
    %48 = vector.load %arg16[%c0_37, %c0_38] : memref<8x32xf32, #tpu.memory_space<vmem>>, vector<8x32xf32>
    %49 = arith.truncf %44 : vector<8x8xf32> to vector<8x8xbf16>
    %c0_39 = arith.constant 0 : index
    %c0_40 = arith.constant 0 : index
    %c0_41 = arith.constant 0 : index
    %50 = vector.load %arg12[%c0_39, %c0_40, %c0_41] : memref<1x8x32xbf16, #tpu.memory_space<vmem>>, vector<1x8x32xbf16>
    %51 = vector.shape_cast %50 : vector<1x8x32xbf16> to vector<8x32xbf16>
    %cst_42 = arith.constant dense<0.000000e+00> : vector<8x32xf32>
    %52 = tpu.matmul %49, %51, %cst_42 {dimension_numbers = #tpu.dot_dimension_numbers<[1], [0], [0], [1], [0, 0, 1, 1], [], []>} : vector<8x8xbf16>, vector<8x32xbf16>, vector<8x32xf32> -> vector<8x32xf32>
    %53 = arith.addf %48, %52 : vector<8x32xf32>
    %c0_43 = arith.constant 0 : index
    %c0_44 = arith.constant 0 : index
    %54 = vector.load %arg16[%c0_43, %c0_44] : memref<8x32xf32, #tpu.memory_space<vmem>>, vector<8x32xf32>
    tpu.vector_store %arg16[%c0_43, %c0_44], %53 {strides = array<i32>} : memref<8x32xf32, #tpu.memory_space<vmem>>, vector<8x32xf32>,
    %c3_i32 = arith.constant 3 : i32
    %55 = arith.cmpi eq, %arg2, %c3_i32 : i32
    %56 = arith.extui %55 : i1 to i32
    %c0_i32_45 = arith.constant 0 : i32
    %57 = arith.cmpi ne, %56, %c0_i32_45 : i32
    scf.if %57 {
      %c0_46 = arith.constant 0 : index
      %c0_47 = arith.constant 0 : index
      %58 = vector.load %arg16[%c0_46, %c0_47] : memref<8x32xf32, #tpu.memory_space<vmem>>, vector<8x32xf32>
      %c0_48 = arith.constant 0 : index
      %c0_49 = arith.constant 0 : index
      %c0_50 = arith.constant 0 : index
      %59 = vector.load %arg14[%c0_48, %c0_49, %c0_50] : memref<1x8x32xf32, #tpu.memory_space<vmem>>, vector<1x8x32xf32>
      %60 = vector.shape_cast %59 : vector<1x8x32xf32> to vector<8x32xf32>
      %61 = vector.shape_cast %58 : vector<8x32xf32> to vector<1x8x32xf32>
      tpu.vector_store %arg14[%c0_48, %c0_49, %c0_50], %61 {strides = array<i32>} : memref<1x8x32xf32, #tpu.memory_space<vmem>>, vector<1x8x32xf32>,
    } else {
    }
    return
  }
  func.func @transform_0(%arg0: i32, %arg1: i32, %arg2: i32) -> (i32, i32, i32) {
    %c0_i32 = arith.constant 0 : i32
    %c0_i32_0 = arith.constant 0 : i32
    return %arg0, %arg1, %c0_i32 : i32, i32, i32
  }
  func.func @transform_1(%arg0: i32, %arg1: i32, %arg2: i32) -> (i32, i32, i32) {
    %c0_i32 = arith.constant 0 : i32
    %c0_i32_0 = arith.constant 0 : i32
    %c0_i32_1 = arith.constant 0 : i32
    return %arg0, %c0_i32, %c0_i32_0 : i32, i32, i32
  }
  func.func @transform_2(%arg0: i32, %arg1: i32, %arg2: i32) -> (i32, i32, i32) {
    %c0_i32 = arith.constant 0 : i32
    %c0_i32_0 = arith.constant 0 : i32
    %c0_i32_1 = arith.constant 0 : i32
    return %arg0, %c0_i32, %c0_i32_0 : i32, i32, i32
  }
  func.func @transform_3(%arg0: i32, %arg1: i32, %arg2: i32) -> (i32, i32, i32) {
    %c0_i32 = arith.constant 0 : i32
    %c0_i32_0 = arith.constant 0 : i32
    %c0_i32_1 = arith.constant 0 : i32
    return %arg2, %c0_i32, %c0_i32_0 : i32, i32, i32
  }
  func.func @transform_4(%arg0: i32, %arg1: i32, %arg2: i32) -> (i32, i32, i32) {
    %c0_i32 = arith.constant 0 : i32
    %c0_i32_0 = arith.constant 0 : i32
    %c0_i32_1 = arith.constant 0 : i32
    return %arg2, %c0_i32, %c0_i32_0 : i32, i32, i32
  }
  func.func @transform_5(%arg0: i32, %arg1: i32, %arg2: i32) -> (i32, i32, i32) {
    %c0_i32 = arith.constant 0 : i32
    %c0_i32_0 = arith.constant 0 : i32
    %c0_i32_1 = arith.constant 0 : i32
    return %arg2, %c0_i32, %c0_i32_0 : i32, i32, i32
  }
  func.func @transform_6(%arg0: i32, %arg1: i32, %arg2: i32) -> (i32, i32, i32) {
    %c0_i32 = arith.constant 0 : i32
    %c0_i32_0 = arith.constant 0 : i32
    %c0_i32_1 = arith.constant 0 : i32
    return %arg2, %c0_i32, %c0_i32_0 : i32, i32, i32
  }
  func.func @transform_7(%arg0: i32, %arg1: i32, %arg2: i32) -> (i32, i32, i32) {
    %c0_i32 = arith.constant 0 : i32
    %c0_i32_0 = arith.constant 0 : i32
    %c0_i32_1 = arith.constant 0 : i32
    return %arg2, %c0_i32, %c0_i32_0 : i32, i32, i32
  }
  func.func @transform_8(%arg0: i32, %arg1: i32, %arg2: i32) -> (i32, i32, i32) {
    %c0_i32 = arith.constant 0 : i32
    %c0_i32_0 = arith.constant 0 : i32
    %c0_i32_1 = arith.constant 0 : i32
    return %arg2, %c0_i32, %c0_i32_0 : i32, i32, i32
  }
  func.func @transform_9(%arg0: i32, %arg1: i32, %arg2: i32) -> (i32, i32, i32) {
    %c0_i32 = arith.constant 0 : i32
    %c0_i32_0 = arith.constant 0 : i32
    %c0_i32_1 = arith.constant 0 : i32
    return %arg2, %c0_i32, %c0_i32_0 : i32, i32, i32
  }
  func.func @transform_10(%arg0: i32, %arg1: i32, %arg2: i32) -> (i32, i32) {
    %c0_i32 = arith.constant 0 : i32
    %c0_i32_0 = arith.constant 0 : i32
    %c0_i32_1 = arith.constant 0 : i32
    return %c0_i32, %c0_i32_0 : i32, i32
  }
  func.func @transform_11(%arg0: i32, %arg1: i32, %arg2: i32) -> (i32, i32, i32) {
    %c0_i32 = arith.constant 0 : i32
    %c0_i32_0 = arith.constant 0 : i32
    return %arg0, %arg1, %c0_i32 : i32, i32, i32
  }
  func.func @transform_12(%arg0: i32, %arg1: i32, %arg2: i32) -> (i32, i32, i32, i32) {
    %c0_i32 = arith.constant 0 : i32
    %c0_i32_0 = arith.constant 0 : i32
    return %arg0, %arg2, %arg1, %c0_i32 : i32, i32, i32, i32
  }
}

</mosaic_0001>

<llo_original>
// kernel: attention_forward.1
$region0: #{attention_forward.1}
  #allocation0 [shape = 'u32[]', space=smem, size = 0x4, offset = 0x4, fixed_abs, tag = 'smem constant byte address 0x4 - core index']
  #allocation1 [shape = 'u32[144,128]{1,0:T(1,128)}', space=vmem, size = 0x12000, scoped, tag = 'internal scratch']
  #allocation2 [shape = 'f32[8,32]{1,0:T(8,128)}', space=vmem, size = 0x1000, scoped, tag = 'scratch operand']
  %s0 = inlined_call_operand.vmem [shape: bf16[2,8,16], index: 0, kind: input, shape index: {}]
  %s1 = inlined_call_operand.vmem [shape: bf16[2,8,16], index: 1, kind: input, shape index: {}]
  %s2 = inlined_call_operand.vmem [shape: bf16[2,8,16], index: 2, kind: input, shape index: {}]
  %s3 = inlined_call_operand.vmem [shape: bf16[4,16,8], index: 3, kind: input, shape index: {}]
  %s4 = inlined_call_operand.vmem [shape: f32[4,1,8], index: 4, kind: input, shape index: {}]
  %s5 = inlined_call_operand.vmem [shape: bf16[4,16,8], index: 5, kind: input, shape index: {}]
  %s6 = inlined_call_operand.vmem [shape: f32[4,1,8], index: 6, kind: input, shape index: {}]
  %s7 = inlined_call_operand.vmem [shape: bf16[4,16,8], index: 7, kind: input, shape index: {}]
  %s8 = inlined_call_operand.vmem [shape: f32[4,1,8], index: 8, kind: input, shape index: {}]
  %s9 = inlined_call_operand.vmem [shape: bf16[4,8,32], index: 9, kind: input, shape index: {}]
  %s10 = inlined_call_operand.vmem [shape: f32[1,32], index: 10, kind: input, shape index: {}]
  %s11 = inlined_call_operand.hbm [shape: f32[2,8,32], index: 11, kind: output, shape index: {0}]
  %s12 = inlined_call_operand.hbm [shape: f32[2,4,8,8], index: 12, kind: output, shape index: {1}]
  %13 = xla_tuple %s11, %s12
  %s14 = sld [smem:[#allocation0]]
  $region93: #{attention_forward.1} parent=0
    _
  %s16 = ssub.s32 1, %s14
  %s17 = scalar_select 0, %s16, %s14
  $region1: #{attention_forward.1} parent=0
    #allocation3 [shape = 'u8[8192]{0}', space=vmem, size = 0x2000, scoped, tag = 'output window, operand 0']
    #allocation4 [shape = 's32[2]{0}', space=sflag, size = 0x8, scoped, tag = 'scoped memory for attention_forward.1']
    #allocation5 [shape = 'u8[8192]{0}', space=vmem, size = 0x2000, scoped, tag = 'output window, operand 1']
    #allocation6 [shape = 's32[2]{0}', space=sflag, size = 0x8, scoped, tag = 'scoped memory for attention_forward.1']
    %18 = vsyncpa [#allocation4], 0
    %s19 = scalar_lea.sflag [#allocation4], 1
    %20 = vsyncpa %s19, 0
    %21 = vsyncpa [#allocation6], 0
    %s22 = scalar_lea.sflag [#allocation6], 1
    %23 = vsyncpa %s22, 0
    loop: start=0, step=1, limit=10
    $region2: #{attention_forward.1} parent=1 // loop_pre_header
      _
    $region3: #{attention_forward.1} parent=1 // loop_header
      %s25 = sphi 0, %s29
      %p26 = scmp.ge.s32.totalorder %s25, 10
      %s32 = sphi 0, %s51
      %s33 = sphi 0, %s47
      %s34 = sphi 0, %s43
      %s35 = sphi 0, %s32
      %s36 = sphi 0, %s33
      %s37 = sphi 0, %s34
      %s38 = sphi 0, %s35
      %s39 = sphi 0, %s36
      %s40 = sphi 0, %s37
      %s56 = sphi 0, %s58
      %s59 = sphi 0, %s56
      %s60 = sphi 0, %s59
      %s76 = sphi 0, %s60
      %s82 = sphi 0, %s84
      %s85 = sphi 0, %s82
      %s86 = sphi 0, %s85
      %s102 = sphi 0, %s86
      %s108 = sphi 0, %s110
      %s111 = sphi 0, %s108
      %s112 = sphi 0, %s111
      %s128 = sphi 0, %s112
      %s134 = sphi 0, %s136
      %s137 = sphi 0, %s134
      %s138 = sphi 0, %s137
      %s154 = sphi 0, %s138
      %s160 = sphi 0, %s162
      %s163 = sphi 0, %s160
      %s164 = sphi 0, %s163
      %s180 = sphi 0, %s164
      %s186 = sphi 0, %s188
      %s189 = sphi 0, %s186
      %s190 = sphi 0, %s189
      %s206 = sphi 0, %s190
      %s212 = sphi 0, %s214
      %s215 = sphi 0, %s212
      %s216 = sphi 0, %s215
      %s232 = sphi 0, %s216
      %s238 = sphi 0, %s240
      %s241 = sphi 0, %s238
      %s242 = sphi 0, %s241
      %s258 = sphi 0, %s242
      %s264 = sphi 0, %s266
      %s267 = sphi 0, %s264
      %s268 = sphi 0, %s267
      %s284 = sphi 0, %s268
      %s290 = sphi 0, %s292
      %s293 = sphi 0, %s290
      %s294 = sphi 0, %s293
      %s310 = sphi 0, %s294
      %s314 = sphi 0, %s314
      %s316 = sphi 0, %s314
      %s317 = sphi 0, %s316
      %s331 = sphi 0, %s317
      %s339 = sphi 0, %s341
      %s342 = sphi 0, %s339
      %s343 = sphi 0, %s342
      %s359 = sphi 0, %s343
      %s369 = sphi 0, %s371
      %s372 = sphi 0, %s369
      %s373 = sphi 0, %s372
      %s389 = sphi 0, %s373
    $region4: #{attention_forward.1} parent=1 // loop_header_branch
      %28 = sbr.rel (%p26) target = $region8
    $region5: #{attention_forward.1} parent=1 // loop_body
      %s30 = ssub.s32 %s25, 1
      %s31 = ssub.s32 %s25, 2
      %s41 = sadd.s32 1, %s34
      %p42 = scmp.ge.s32.totalorder %s41, 4
      %s43 = scalar_select %p42, 0, %s41
      %s44 = sadd.s32 1, %s33
      %s45 = scalar_select %p42, %s44, %s33
      %p46 = scmp.ge.s32.totalorder %s45, 1
      %s47 = scalar_select %p46, 0, %s45
      %s48 = sadd.s32 1, %s32
      %s49 = scalar_select %p46, %s48, %s32
      %p50 = scmp.ge.s32.totalorder %s49, 2
      %s51 = scalar_select %p50, 0, %s49
      %s52 = ssub.s32 %s32, %s51
      %s53 = ssub.s32 %s33, %s47
      %s54 = sor.u32 %s52, %s53
      %p55 = scmp.eq.s32.totalorder %s54, 0
      %s57 = sadd.s32 %s56, 1
      %s58 = scalar_select %p55, %s56, %s57
      %p61 = pneg %p55
      %p62 = scmp.eq.s32.totalorder %s25, 7
      %p63 = por %p61, %p62
      %p64 = scmp.ne.s32.totalorder %s56, %s59
      %p65 = scmp.eq.s32.totalorder %s25, 0
      %p66 = por %p64, %p65
      %p67 = scmp.ne.s32.totalorder %s56, %s59
      %p68 = scmp.eq.s32.totalorder %s30, 7
      %p69 = por %p67, %p68
      %p70 = scmp.ne.s32.totalorder %s59, %s60
      %p71 = scmp.eq.s32.totalorder %s30, 0
      %p72 = por %p70, %p71
      %p73 = scmp.ne.s32.totalorder %s59, %s60
      %p74 = scmp.eq.s32.totalorder %s31, 7
      %p75 = por %p73, %p74
      %p77 = scmp.ne.s32.totalorder %s60, %s76
      %p78 = scmp.eq.s32.totalorder %s31, 0
      %p79 = por %p77, %p78
      %s80 = ssub.s32 %s32, %s51
      %p81 = scmp.eq.s32.totalorder %s80, 0
      %s83 = sadd.s32 %s82, 1
      %s84 = scalar_select %p81, %s82, %s83
      %p87 = pneg %p81
      %p88 = scmp.eq.s32.totalorder %s25, 7
      %p89 = por %p87, %p88
      %p90 = scmp.ne.s32.totalorder %s82, %s85
      %p91 = scmp.eq.s32.totalorder %s25, 0
      %p92 = por %p90, %p91
      %p93 = scmp.ne.s32.totalorder %s82, %s85
      %p94 = scmp.eq.s32.totalorder %s30, 7
      %p95 = por %p93, %p94
      %p96 = scmp.ne.s32.totalorder %s85, %s86
      %p97 = scmp.eq.s32.totalorder %s30, 0
      %p98 = por %p96, %p97
      %p99 = scmp.ne.s32.totalorder %s85, %s86
      %p100 = scmp.eq.s32.totalorder %s31, 7
      %p101 = por %p99, %p100
      %p103 = scmp.ne.s32.totalorder %s86, %s102
      %p104 = scmp.eq.s32.totalorder %s31, 0
      %p105 = por %p103, %p104
      %s106 = ssub.s32 %s32, %s51
      %p107 = scmp.eq.s32.totalorder %s106, 0
      %s109 = sadd.s32 %s108, 1
      %s110 = scalar_select %p107, %s108, %s109
      %p113 = pneg %p107
      %p114 = scmp.eq.s32.totalorder %s25, 7
      %p115 = por %p113, %p114
      %p116 = scmp.ne.s32.totalorder %s108, %s111
      %p117 = scmp.eq.s32.totalorder %s25, 0
      %p118 = por %p116, %p117
      %p119 = scmp.ne.s32.totalorder %s108, %s111
      %p120 = scmp.eq.s32.totalorder %s30, 7
      %p121 = por %p119, %p120
      %p122 = scmp.ne.s32.totalorder %s111, %s112
      %p123 = scmp.eq.s32.totalorder %s30, 0
      %p124 = por %p122, %p123
      %p125 = scmp.ne.s32.totalorder %s111, %s112
      %p126 = scmp.eq.s32.totalorder %s31, 7
      %p127 = por %p125, %p126
      %p129 = scmp.ne.s32.totalorder %s112, %s128
      %p130 = scmp.eq.s32.totalorder %s31, 0
      %p131 = por %p129, %p130
      %s132 = ssub.s32 %s34, %s43
      %p133 = scmp.eq.s32.totalorder %s132, 0
      %s135 = sadd.s32 %s134, 1
      %s136 = scalar_select %p133, %s134, %s135
      %p139 = pneg %p133
      %p140 = scmp.eq.s32.totalorder %s25, 7
      %p141 = por %p139, %p140
      %p142 = scmp.ne.s32.totalorder %s134, %s137
      %p143 = scmp.eq.s32.totalorder %s25, 0
      %p144 = por %p142, %p143
      %p145 = scmp.ne.s32.totalorder %s134, %s137
      %p146 = scmp.eq.s32.totalorder %s30, 7
      %p147 = por %p145, %p146
      %p148 = scmp.ne.s32.totalorder %s137, %s138
      %p149 = scmp.eq.s32.totalorder %s30, 0
      %p150 = por %p148, %p149
      %p151 = scmp.ne.s32.totalorder %s137, %s138
      %p152 = scmp.eq.s32.totalorder %s31, 7
      %p153 = por %p151, %p152
      %p155 = scmp.ne.s32.totalorder %s138, %s154
      %p156 = scmp.eq.s32.totalorder %s31, 0
      %p157 = por %p155, %p156
      %s158 = ssub.s32 %s34, %s43
      %p159 = scmp.eq.s32.totalorder %s158, 0
      %s161 = sadd.s32 %s160, 1
      %s162 = scalar_select %p159, %s160, %s161
      %p165 = pneg %p159
      %p166 = scmp.eq.s32.totalorder %s25, 7
      %p167 = por %p165, %p166
      %p168 = scmp.ne.s32.totalorder %s160, %s163
      %p169 = scmp.eq.s32.totalorder %s25, 0
      %p170 = por %p168, %p169
      %p171 = scmp.ne.s32.totalorder %s160, %s163
      %p172 = scmp.eq.s32.totalorder %s30, 7
      %p173 = por %p171, %p172
      %p174 = scmp.ne.s32.totalorder %s163, %s164
      %p175 = scmp.eq.s32.totalorder %s30, 0
      %p176 = por %p174, %p175
      %p177 = scmp.ne.s32.totalorder %s163, %s164
      %p178 = scmp.eq.s32.totalorder %s31, 7
      %p179 = por %p177, %p178
      %p181 = scmp.ne.s32.totalorder %s164, %s180
      %p182 = scmp.eq.s32.totalorder %s31, 0
      %p183 = por %p181, %p182
      %s184 = ssub.s32 %s34, %s43
      %p185 = scmp.eq.s32.totalorder %s184, 0
      %s187 = sadd.s32 %s186, 1
      %s188 = scalar_select %p185, %s186, %s187
      %p191 = pneg %p185
      %p192 = scmp.eq.s32.totalorder %s25, 7
      %p193 = por %p191, %p192
      %p194 = scmp.ne.s32.totalorder %s186, %s189
      %p195 = scmp.eq.s32.totalorder %s25, 0
      %p196 = por %p194, %p195
      %p197 = scmp.ne.s32.totalorder %s186, %s189
      %p198 = scmp.eq.s32.totalorder %s30, 7
      %p199 = por %p197, %p198
      %p200 = scmp.ne.s32.totalorder %s189, %s190
      %p201 = scmp.eq.s32.totalorder %s30, 0
      %p202 = por %p200, %p201
      %p203 = scmp.ne.s32.totalorder %s189, %s190
      %p204 = scmp.eq.s32.totalorder %s31, 7
      %p205 = por %p203, %p204
      %p207 = scmp.ne.s32.totalorder %s190, %s206
      %p208 = scmp.eq.s32.totalorder %s31, 0
      %p209 = por %p207, %p208
      %s210 = ssub.s32 %s34, %s43
      %p211 = scmp.eq.s32.totalorder %s210, 0
      %s213 = sadd.s32 %s212, 1
      %s214 = scalar_select %p211, %s212, %s213
      %p217 = pneg %p211
      %p218 = scmp.eq.s32.totalorder %s25, 7
      %p219 = por %p217, %p218
      %p220 = scmp.ne.s32.totalorder %s212, %s215
      %p221 = scmp.eq.s32.totalorder %s25, 0
      %p222 = por %p220, %p221
      %p223 = scmp.ne.s32.totalorder %s212, %s215
      %p224 = scmp.eq.s32.totalorder %s30, 7
      %p225 = por %p223, %p224
      %p226 = scmp.ne.s32.totalorder %s215, %s216
      %p227 = scmp.eq.s32.totalorder %s30, 0
      %p228 = por %p226, %p227
      %p229 = scmp.ne.s32.totalorder %s215, %s216
      %p230 = scmp.eq.s32.totalorder %s31, 7
      %p231 = por %p229, %p230
      %p233 = scmp.ne.s32.totalorder %s216, %s232
      %p234 = scmp.eq.s32.totalorder %s31, 0
      %p235 = por %p233, %p234
      %s236 = ssub.s32 %s34, %s43
      %p237 = scmp.eq.s32.totalorder %s236, 0
      %s239 = sadd.s32 %s238, 1
      %s240 = scalar_select %p237, %s238, %s239
      %p243 = pneg %p237
      %p244 = scmp.eq.s32.totalorder %s25, 7
      %p245 = por %p243, %p244
      %p246 = scmp.ne.s32.totalorder %s238, %s241
      %p247 = scmp.eq.s32.totalorder %s25, 0
      %p248 = por %p246, %p247
      %p249 = scmp.ne.s32.totalorder %s238, %s241
      %p250 = scmp.eq.s32.totalorder %s30, 7
      %p251 = por %p249, %p250
      %p252 = scmp.ne.s32.totalorder %s241, %s242
      %p253 = scmp.eq.s32.totalorder %s30, 0
      %p254 = por %p252, %p253
      %p255 = scmp.ne.s32.totalorder %s241, %s242
      %p256 = scmp.eq.s32.totalorder %s31, 7
      %p257 = por %p255, %p256
      %p259 = scmp.ne.s32.totalorder %s242, %s258
      %p260 = scmp.eq.s32.totalorder %s31, 0
      %p261 = por %p259, %p260
      %s262 = ssub.s32 %s34, %s43
      %p263 = scmp.eq.s32.totalorder %s262, 0
      %s265 = sadd.s32 %s264, 1
      %s266 = scalar_select %p263, %s264, %s265
      %p269 = pneg %p263
      %p270 = scmp.eq.s32.totalorder %s25, 7
      %p271 = por %p269, %p270
      %p272 = scmp.ne.s32.totalorder %s264, %s267
      %p273 = scmp.eq.s32.totalorder %s25, 0
      %p274 = por %p272, %p273
      %p275 = scmp.ne.s32.totalorder %s264, %s267
      %p276 = scmp.eq.s32.totalorder %s30, 7
      %p277 = por %p275, %p276
      %p278 = scmp.ne.s32.totalorder %s267, %s268
      %p279 = scmp.eq.s32.totalorder %s30, 0
      %p280 = por %p278, %p279
      %p281 = scmp.ne.s32.totalorder %s267, %s268
      %p282 = scmp.eq.s32.totalorder %s31, 7
      %p283 = por %p281, %p282
      %p285 = scmp.ne.s32.totalorder %s268, %s284
      %p286 = scmp.eq.s32.totalorder %s31, 0
      %p287 = por %p285, %p286
      %s288 = ssub.s32 %s34, %s43
      %p289 = scmp.eq.s32.totalorder %s288, 0
      %s291 = sadd.s32 %s290, 1
      %s292 = scalar_select %p289, %s290, %s291
      %p295 = pneg %p289
      %p296 = scmp.eq.s32.totalorder %s25, 7
      %p297 = por %p295, %p296
      %p298 = scmp.ne.s32.totalorder %s290, %s293
      %p299 = scmp.eq.s32.totalorder %s25, 0
      %p300 = por %p298, %p299
      %p301 = scmp.ne.s32.totalorder %s290, %s293
      %p302 = scmp.eq.s32.totalorder %s30, 7
      %p303 = por %p301, %p302
      %p304 = scmp.ne.s32.totalorder %s293, %s294
      %p305 = scmp.eq.s32.totalorder %s30, 0
      %p306 = por %p304, %p305
      %p307 = scmp.ne.s32.totalorder %s293, %s294
      %p308 = scmp.eq.s32.totalorder %s31, 7
      %p309 = por %p307, %p308
      %p311 = scmp.ne.s32.totalorder %s294, %s310
      %p312 = scmp.eq.s32.totalorder %s31, 0
      %p313 = por %p311, %p312
      %s315 = sadd.s32 %s314, 1
      %p318 = scmp.eq.s32.totalorder %s25, 7
      %p319 = scmp.ne.s32.totalorder %s314, %s316
      %p320 = scmp.eq.s32.totalorder %s25, 0
      %p321 = por %p319, %p320
      %p322 = scmp.ne.s32.totalorder %s314, %s316
      %p323 = scmp.eq.s32.totalorder %s30, 7
      %p324 = por %p322, %p323
      %p325 = scmp.ne.s32.totalorder %s316, %s317
      %p326 = scmp.eq.s32.totalorder %s30, 0
      %p327 = por %p325, %p326
      %p328 = scmp.ne.s32.totalorder %s316, %s317
      %p329 = scmp.eq.s32.totalorder %s31, 7
      %p330 = por %p328, %p329
      %p332 = scmp.ne.s32.totalorder %s317, %s331
      %p333 = scmp.eq.s32.totalorder %s31, 0
      %p334 = por %p332, %p333
      %s335 = ssub.s32 %s32, %s51
      %s336 = ssub.s32 %s33, %s47
      %s337 = sor.u32 %s335, %s336
      %p338 = scmp.eq.s32.totalorder %s337, 0
      %s340 = sadd.s32 %s339, 1
      %s341 = scalar_select %p338, %s339, %s340
      %p344 = pneg %p338
      %p345 = scmp.eq.s32.totalorder %s25, 7
      %p346 = por %p344, %p345
      %p347 = scmp.ne.s32.totalorder %s339, %s342
      %p348 = scmp.eq.s32.totalorder %s25, 0
      %p349 = por %p347, %p348
      %p350 = scmp.ne.s32.totalorder %s339, %s342
      %p351 = scmp.eq.s32.totalorder %s30, 7
      %p352 = por %p350, %p351
      %p353 = scmp.ne.s32.totalorder %s342, %s343
      %p354 = scmp.eq.s32.totalorder %s30, 0
      %p355 = por %p353, %p354
      %p356 = scmp.ne.s32.totalorder %s342, %s343
      %p357 = scmp.eq.s32.totalorder %s31, 7
      %p358 = por %p356, %p357
      %p360 = scmp.ne.s32.totalorder %s343, %s359
      %p361 = scmp.eq.s32.totalorder %s31, 0
      %p362 = por %p360, %p361
      %s363 = ssub.s32 %s32, %s51
      %s364 = ssub.s32 %s34, %s43
      %s365 = sor.u32 %s363, %s364
      %s366 = ssub.s32 %s33, %s47
      %s367 = sor.u32 %s365, %s366
      %p368 = scmp.eq.s32.totalorder %s367, 0
      %s370 = sadd.s32 %s369, 1
      %s371 = scalar_select %p368, %s369, %s370
      %p374 = pneg %p368
      %p375 = scmp.eq.s32.totalorder %s25, 7
      %p376 = por %p374, %p375
      %p377 = scmp.ne.s32.totalorder %s369, %s372
      %p378 = scmp.eq.s32.totalorder %s25, 0
      %p379 = por %p377, %p378
      %p380 = scmp.ne.s32.totalorder %s369, %s372
      %p381 = scmp.eq.s32.totalorder %s30, 7
      %p382 = por %p380, %p381
      %p383 = scmp.ne.s32.totalorder %s372, %s373
      %p384 = scmp.eq.s32.totalorder %s30, 0
      %p385 = por %p383, %p384
      %p386 = scmp.ne.s32.totalorder %s372, %s373
      %p387 = scmp.eq.s32.totalorder %s31, 7
      %p388 = por %p386, %p387
      %p390 = scmp.ne.s32.totalorder %s373, %s389
      %p391 = scmp.eq.s32.totalorder %s31, 0
      %p392 = por %p390, %p391
      %p393 = scmp.le.s32.totalorder 1, %s25
      %p394 = scmp.lt.s32.totalorder %s25, 9
      %p395 = pnand %p393, %p394
      %p396 = pneg %p395
      // Predicated region
      $region9: #{attention_forward.1} parent=5 // pred_check
        _
      $region10: #{attention_forward.1} parent=5 // pred_check_branch
        %398 = sbr.rel (%p395) target = $region12
      $region11: #{attention_forward.1} parent=5 // pred_region
        %s399 = ssub.s32 %s25, 1
        // Predicated region
        $region13: #{attention_forward.1} parent=11 // pred_check
          %p400 = pneg %p327
        $region14: #{attention_forward.1} parent=11 // pred_check_branch
          %402 = sbr.rel (%p400) target = $region16
        $region15: #{attention_forward.1} parent=11 // pred_region
          _
        $region16: #{attention_forward.1} parent=11 // pred_fallthru
          _
      $region12: #{attention_forward.1} parent=5 // pred_fallthru
        _
      %p403 = scmp.lt.s32.totalorder %s25, 8
      // Predicated region
      $region17: #{attention_forward.1} parent=5 // pred_check
        %p404 = pneg %p403
      $region18: #{attention_forward.1} parent=5 // pred_check_branch
        %406 = sbr.rel (%p404) target = $region20
      $region19: #{attention_forward.1} parent=5 // pred_region
        // Predicated region
        $region21: #{attention_forward.1} parent=19 // pred_check
          %p407 = pneg %p66
        $region22: #{attention_forward.1} parent=19 // pred_check_branch
          %409 = sbr.rel (%p407) target = $region24
        $region23: #{attention_forward.1} parent=19 // pred_region
          %p410 = scmp.lt.s32.totalorder %s32, 1
          %s411 = scalar_select %p410, %s32, 1
          %p412 = scmp.lt.s32.totalorder %s33, 0
          %s413 = scalar_select %p412, %s33, 0
          %s414 = sadd.s32 %s413, %s411
          %s415 = smul.addr %s414, 4
          %s416 = scalar_lea.vmem %s0, %s415
        $region24: #{attention_forward.1} parent=19 // pred_fallthru
          _
        // Predicated region
        $region25: #{attention_forward.1} parent=19 // pred_check
          %p417 = pneg %p92
        $region26: #{attention_forward.1} parent=19 // pred_check_branch
          %419 = sbr.rel (%p417) target = $region28
        $region27: #{attention_forward.1} parent=19 // pred_region
          %p420 = scmp.lt.s32.totalorder %s32, 1
          %s421 = scalar_select %p420, %s32, 1
          %s422 = smul.addr %s421, 4
          %s423 = scalar_lea.vmem %s1, %s422
        $region28: #{attention_forward.1} parent=19 // pred_fallthru
          _
        // Predicated region
        $region29: #{attention_forward.1} parent=19 // pred_check
          %p424 = pneg %p118
        $region30: #{attention_forward.1} parent=19 // pred_check_branch
          %426 = sbr.rel (%p424) target = $region32
        $region31: #{attention_forward.1} parent=19 // pred_region
          %p427 = scmp.lt.s32.totalorder %s32, 1
          %s428 = scalar_select %p427, %s32, 1
          %s429 = smul.addr %s428, 4
          %s430 = scalar_lea.vmem %s2, %s429
        $region32: #{attention_forward.1} parent=19 // pred_fallthru
          _
        // Predicated region
        $region33: #{attention_forward.1} parent=19 // pred_check
          %p431 = pneg %p144
        $region34: #{attention_forward.1} parent=19 // pred_check_branch
          %433 = sbr.rel (%p431) target = $region36
        $region35: #{attention_forward.1} parent=19 // pred_region
          %p434 = scmp.lt.s32.totalorder %s34, 3
          %s435 = scalar_select %p434, %s34, 3
          %s436 = smul.addr %s435, 2
          %s437 = smul.addr %s436, 4
          %s438 = scalar_lea.vmem %s3, %s437
        $region36: #{attention_forward.1} parent=19 // pred_fallthru
          _
        // Predicated region
        $region37: #{attention_forward.1} parent=19 // pred_check
          %p439 = pneg %p170
        $region38: #{attention_forward.1} parent=19 // pred_check_branch
          %441 = sbr.rel (%p439) target = $region40
        $region39: #{attention_forward.1} parent=19 // pred_region
          %p442 = scmp.lt.s32.totalorder %s34, 3
          %s443 = scalar_select %p442, %s34, 3
          %s444 = scalar_lea.vmem %s4, %s443
        $region40: #{attention_forward.1} parent=19 // pred_fallthru
          _
        // Predicated region
        $region41: #{attention_forward.1} parent=19 // pred_check
          %p445 = pneg %p196
        $region42: #{attention_forward.1} parent=19 // pred_check_branch
          %447 = sbr.rel (%p445) target = $region44
        $region43: #{attention_forward.1} parent=19 // pred_region
          %p448 = scmp.lt.s32.totalorder %s34, 3
          %s449 = scalar_select %p448, %s34, 3
          %s450 = smul.addr %s449, 2
          %s451 = smul.addr %s450, 4
          %s452 = scalar_lea.vmem %s5, %s451
        $region44: #{attention_forward.1} parent=19 // pred_fallthru
          _
        // Predicated region
        $region45: #{attention_forward.1} parent=19 // pred_check
          %p453 = pneg %p222
        $region46: #{attention_forward.1} parent=19 // pred_check_branch
          %455 = sbr.rel (%p453) target = $region48
        $region47: #{attention_forward.1} parent=19 // pred_region
          %p456 = scmp.lt.s32.totalorder %s34, 3
          %s457 = scalar_select %p456, %s34, 3
          %s458 = scalar_lea.vmem %s6, %s457
        $region48: #{attention_forward.1} parent=19 // pred_fallthru
          _
        // Predicated region
        $region49: #{attention_forward.1} parent=19 // pred_check
          %p459 = pneg %p248
        $region50: #{attention_forward.1} parent=19 // pred_check_branch
          %461 = sbr.rel (%p459) target = $region52
        $region51: #{attention_forward.1} parent=19 // pred_region
          %p462 = scmp.lt.s32.totalorder %s34, 3
          %s463 = scalar_select %p462, %s34, 3
          %s464 = smul.addr %s463, 2
          %s465 = smul.addr %s464, 4
          %s466 = scalar_lea.vmem %s7, %s465
        $region52: #{attention_forward.1} parent=19 // pred_fallthru
          _
        // Predicated region
        $region53: #{attention_forward.1} parent=19 // pred_check
          %p467 = pneg %p274
        $region54: #{attention_forward.1} parent=19 // pred_check_branch
          %469 = sbr.rel (%p467) target = $region56
        $region55: #{attention_forward.1} parent=19 // pred_region
          %p470 = scmp.lt.s32.totalorder %s34, 3
          %s471 = scalar_select %p470, %s34, 3
          %s472 = scalar_lea.vmem %s8, %s471
        $region56: #{attention_forward.1} parent=19 // pred_fallthru
          _
        // Predicated region
        $region57: #{attention_forward.1} parent=19 // pred_check
          %p473 = pneg %p300
        $region58: #{attention_forward.1} parent=19 // pred_check_branch
          %475 = sbr.rel (%p473) target = $region60
        $region59: #{attention_forward.1} parent=19 // pred_region
          %p476 = scmp.lt.s32.totalorder %s34, 3
          %s477 = scalar_select %p476, %s34, 3
          %s478 = smul.addr %s477, 4
          %s479 = scalar_lea.vmem %s9, %s478
        $region60: #{attention_forward.1} parent=19 // pred_fallthru
          _
      $region20: #{attention_forward.1} parent=5 // pred_fallthru
        _
      %p480 = scmp.le.s32.totalorder 1, %s25
      %p481 = scmp.lt.s32.totalorder %s25, 9
      %p482 = pnand %p480, %p481
      %p483 = pneg %p482
      // Predicated region
      $region61: #{attention_forward.1} parent=5 // pred_check
        _
      $region62: #{attention_forward.1} parent=5 // pred_check_branch
        %485 = sbr.rel (%p482) target = $region64
      $region63: #{attention_forward.1} parent=5 // pred_region
        %s486 = ssub.s32 %s25, 1
        %p487 = scmp.lt.s32.totalorder %s35, 1
        %s488 = scalar_select %p487, %s35, 1
        %p489 = scmp.lt.s32.totalorder %s36, 0
        %s490 = scalar_select %p489, %s36, 0
        %s491 = sadd.s32 %s490, %s488
        %s492 = smul.addr %s491, 4
        %s493 = scalar_lea.vmem %s0, %s492
        %p494 = pneg %p72
        %p495 = pneg %p69
        %p496 = scmp.lt.s32.totalorder %s35, 1
        %s497 = scalar_select %p496, %s35, 1
        %s498 = smul.addr %s497, 4
        %s499 = scalar_lea.vmem %s1, %s498
        %p500 = pneg %p98
        %p501 = pneg %p95
        %p502 = scmp.lt.s32.totalorder %s35, 1
        %s503 = scalar_select %p502, %s35, 1
        %s504 = smul.addr %s503, 4
        %s505 = scalar_lea.vmem %s2, %s504
        %p506 = pneg %p124
        %p507 = pneg %p121
        %p508 = scmp.lt.s32.totalorder %s37, 3
        %s509 = scalar_select %p508, %s37, 3
        %s510 = smul.addr %s509, 2
        %s511 = smul.addr %s510, 4
        %s512 = scalar_lea.vmem %s3, %s511
        %p513 = pneg %p150
        %p514 = pneg %p147
        %p515 = scmp.lt.s32.totalorder %s37, 3
        %s516 = scalar_select %p515, %s37, 3
        %s517 = scalar_lea.vmem %s4, %s516
        %p518 = pneg %p176
        %p519 = pneg %p173
        %p520 = scmp.lt.s32.totalorder %s37, 3
        %s521 = scalar_select %p520, %s37, 3
        %s522 = smul.addr %s521, 2
        %s523 = smul.addr %s522, 4
        %s524 = scalar_lea.vmem %s5, %s523
        %p525 = pneg %p202
        %p526 = pneg %p199
        %p527 = scmp.lt.s32.totalorder %s37, 3
        %s528 = scalar_select %p527, %s37, 3
        %s529 = scalar_lea.vmem %s6, %s528
        %p530 = pneg %p228
        %p531 = pneg %p225
        %p532 = scmp.lt.s32.totalorder %s37, 3
        %s533 = scalar_select %p532, %s37, 3
        %s534 = smul.addr %s533, 2
        %s535 = smul.addr %s534, 4
        %s536 = scalar_lea.vmem %s7, %s535
        %p537 = pneg %p254
        %p538 = pneg %p251
        %p539 = scmp.lt.s32.totalorder %s37, 3
        %s540 = scalar_select %p539, %s37, 3
        %s541 = scalar_lea.vmem %s8, %s540
        %p542 = pneg %p280
        %p543 = pneg %p277
        %p544 = scmp.lt.s32.totalorder %s37, 3
        %s545 = scalar_select %p544, %s37, 3
        %s546 = smul.addr %s545, 4
        %s547 = scalar_lea.vmem %s9, %s546
        %p548 = pneg %p306
        %p549 = pneg %p303
        %p550 = pneg %p327
        %p551 = pneg %p324
        %p552 = pneg %p355
        %p553 = pneg %p352
        %s554 = sand.u32 %s342, 1
        %s555 = scalar_lea.sflag [#allocation4], %s554
        %s556 = sand.u32 %s342, 1
        %s557 = smul.addr %s556, 8
        %s558 = scalar_lea.vmem [#allocation3], %s557
        %p559 = pneg %p385
        %p560 = pneg %p382
        %s561 = sand.u32 %s372, 1
        %s562 = scalar_lea.sflag [#allocation6], %s561
        %s563 = sand.u32 %s372, 1
        %s564 = smul.addr %s563, 8
        %s565 = scalar_lea.vmem [#allocation5], %s564
        %p566 = scmp.lt.s32.totalorder %s35, 1
        %s567 = scalar_select %p566, %s35, 1
        %p568 = scmp.lt.s32.totalorder %s36, 0
        %s569 = scalar_select %p568, %s36, 0
        %s570 = sadd.s32 %s569, %s567
        %s571 = smul.addr %s570, 4
        %s572 = scalar_lea.vmem %s0, %s571
        %p573 = scmp.lt.s32.totalorder %s35, 1
        %s574 = scalar_select %p573, %s35, 1
        %s575 = smul.addr %s574, 4
        %s576 = scalar_lea.vmem %s1, %s575
        %p577 = scmp.lt.s32.totalorder %s35, 1
        %s578 = scalar_select %p577, %s35, 1
        %s579 = smul.addr %s578, 4
        %s580 = scalar_lea.vmem %s2, %s579
        %p581 = scmp.lt.s32.totalorder %s37, 3
        %s582 = scalar_select %p581, %s37, 3
        %s583 = smul.addr %s582, 2
        %s584 = smul.addr %s583, 4
        %s585 = scalar_lea.vmem %s3, %s584
        %p586 = scmp.lt.s32.totalorder %s37, 3
        %s587 = scalar_select %p586, %s37, 3
        %s588 = scalar_lea.vmem %s4, %s587
        %p589 = scmp.lt.s32.totalorder %s37, 3
        %s590 = scalar_select %p589, %s37, 3
        %s591 = smul.addr %s590, 2
        %s592 = smul.addr %s591, 4
        %s593 = scalar_lea.vmem %s5, %s592
        %p594 = scmp.lt.s32.totalorder %s37, 3
        %s595 = scalar_select %p594, %s37, 3
        %s596 = scalar_lea.vmem %s6, %s595
        %p597 = scmp.lt.s32.totalorder %s37, 3
        %s598 = scalar_select %p597, %s37, 3
        %s599 = smul.addr %s598, 2
        %s600 = smul.addr %s599, 4
        %s601 = scalar_lea.vmem %s7, %s600
        %p602 = scmp.lt.s32.totalorder %s37, 3
        %s603 = scalar_select %p602, %s37, 3
        %s604 = scalar_lea.vmem %s8, %s603
        %p605 = scmp.lt.s32.totalorder %s37, 3
        %s606 = scalar_select %p605, %s37, 3
        %s607 = smul.addr %s606, 4
        %s608 = scalar_lea.vmem %s9, %s607
        %v610 = vld [vmem:[%s572] sm:$0xf]
        %v611 = vld [vmem:[%s585] sm:$0xf]
        %v612 = vld [vmem:[%s585 + $0x4] sm:$0xf]
        %v613 = vld [vmem:[%s588] sm:$0x1]
        %v615 = vlaneseq
        %v616 = vshrl.u32 %v615, 7
        %v617 = vsub.s32 0, %v616
        %v618 = vrot.slane %v613, %v617
        %v622 = vunpack.c.l.b16 %v611
        %v623 = vunpack.c.l.b16 %v612
        %v624 = vpack.c.b16 %v623, %v622
        %vm626 = vcmask 130048
        %v628 = vsel %vm626, %v610, 0
        %630 = vmatprep.subr.bf16.mxu0 0
        %631 = vmatpush1.bf16.msra.mxu0 %v624
        %632 = vmatprep.subr.bf16.mxu0 0
        %633 = vmatpush1.bf16.msra.mxu0 0
        %634 = vmatprep.subr.bf16.mxu0 0
        %635 = vmatpush1.bf16.msra.mxu0 0
        %636 = vmatprep.subr.bf16.mxu0 0
        %637 = vmatpush1.bf16.msra.mxu0 0
        %638 = vmatprep.subr.bf16.mxu0 0
        %639 = vmatpush1.bf16.msra.mxu0 0
        %640 = vmatprep.subr.bf16.mxu0 0
        %641 = vmatpush1.bf16.msra.mxu0 0
        %642 = vmatprep.subr.bf16.mxu0 0
        %643 = vmatpush1.bf16.msra.mxu0 0
        %644 = vmatprep.subr.bf16.mxu0 0
        %645 = vmatpush1.bf16.msra.mxu0 0
        %646 = vmatprep.subr.bf16.mxu0 0
        %647 = vmatpush1.bf16.msra.mxu0 0
        %648 = vmatprep.subr.bf16.mxu0 0
        %649 = vmatpush1.bf16.msra.mxu0 0
        %650 = vmatprep.subr.bf16.mxu0 0
        %651 = vmatpush1.bf16.msra.mxu0 0
        %652 = vmatprep.subr.bf16.mxu0 0
        %653 = vmatpush1.bf16.msra.mxu0 0
        %654 = vmatprep.subr.bf16.mxu0 0
        %655 = vmatpush1.bf16.msra.mxu0 0
        %656 = vmatprep.subr.bf16.mxu0 0
        %657 = vmatpush1.bf16.msra.mxu0 0
        %658 = vmatprep.subr.bf16.mxu0 0
        %659 = vmatpush1.bf16.msra.mxu0 0
        %660 = vmatprep.subr.bf16.mxu0 0
        %661 = vmatpush1.bf16.msra.mxu0 0
        %662 = vmatprep.mubr.bf16.mxu0 0
        %663 = vmatmul.mubr.bf16.gmra.mrb[0].mxu0 %v628
        %v664 = vpop.f32.mrb[0].mxu0
        %v665 = vadd.f32 %v618, %v664
        %v666 = vpop.f32.mrb[0].mxu0
        %v667 = vpop.f32.mrb[0].mxu0
        %v668 = vpop.f32.mrb[0].mxu0
        %669 = vdwg.mxu0
        %v670 = vld [vmem:[%s576] sm:$0xf]
        %v671 = vld [vmem:[%s593] sm:$0xf]
        %v672 = vld [vmem:[%s593 + $0x4] sm:$0xf]
        %v673 = vld [vmem:[%s596] sm:$0x1]
        %v675 = vlaneseq
        %v676 = vshrl.u32 %v675, 7
        %v677 = vsub.s32 0, %v676
        %v678 = vrot.slane %v673, %v677
        %v682 = vunpack.c.l.b16 %v671
        %v683 = vunpack.c.l.b16 %v672
        %v684 = vpack.c.b16 %v683, %v682
        %v687 = vsel %vm626, %v670, 0
        %689 = vmatprep.subr.bf16.mxu0 0
        %690 = vmatpush1.bf16.msra.mxu0 %v684
        %691 = vmatprep.subr.bf16.mxu0 0
        %692 = vmatpush1.bf16.msra.mxu0 0
        %693 = vmatprep.subr.bf16.mxu0 0
        %694 = vmatpush1.bf16.msra.mxu0 0
        %695 = vmatprep.subr.bf16.mxu0 0
        %696 = vmatpush1.bf16.msra.mxu0 0
        %697 = vmatprep.subr.bf16.mxu0 0
        %698 = vmatpush1.bf16.msra.mxu0 0
        %699 = vmatprep.subr.bf16.mxu0 0
        %700 = vmatpush1.bf16.msra.mxu0 0
        %701 = vmatprep.subr.bf16.mxu0 0
        %702 = vmatpush1.bf16.msra.mxu0 0
        %703 = vmatprep.subr.bf16.mxu0 0
        %704 = vmatpush1.bf16.msra.mxu0 0
        %705 = vmatprep.subr.bf16.mxu0 0
        %706 = vmatpush1.bf16.msra.mxu0 0
        %707 = vmatprep.subr.bf16.mxu0 0
        %708 = vmatpush1.bf16.msra.mxu0 0
        %709 = vmatprep.subr.bf16.mxu0 0
        %710 = vmatpush1.bf16.msra.mxu0 0
        %711 = vmatprep.subr.bf16.mxu0 0
        %712 = vmatpush1.bf16.msra.mxu0 0
        %713 = vmatprep.subr.bf16.mxu0 0
        %714 = vmatpush1.bf16.msra.mxu0 0
        %715 = vmatprep.subr.bf16.mxu0 0
        %716 = vmatpush1.bf16.msra.mxu0 0
        %717 = vmatprep.subr.bf16.mxu0 0
        %718 = vmatpush1.bf16.msra.mxu0 0
        %719 = vmatprep.subr.bf16.mxu0 0
        %720 = vmatpush1.bf16.msra.mxu0 0
        %721 = vmatprep.mubr.bf16.mxu0 0
        %722 = vmatmul.mubr.bf16.gmra.mrb[0].mxu0 %v687
        %v723 = vpop.f32.mrb[0].mxu0
        %v724 = vadd.f32 %v678, %v723
        %v725 = vpop.f32.mrb[0].mxu0
        %v726 = vpop.f32.mrb[0].mxu0
        %v727 = vpop.f32.mrb[0].mxu0
        %728 = vdwg.mxu0
        %v729 = vld [vmem:[%s580] sm:$0xf]
        %v730 = vld [vmem:[%s601] sm:$0xf]
        %v731 = vld [vmem:[%s601 + $0x4] sm:$0xf]
        %v732 = vld [vmem:[%s604] sm:$0x1]
        %v734 = vlaneseq
        %v735 = vshrl.u32 %v734, 7
        %v736 = vsub.s32 0, %v735
        %v737 = vrot.slane %v732, %v736
        %v741 = vunpack.c.l.b16 %v730
        %v742 = vunpack.c.l.b16 %v731
        %v743 = vpack.c.b16 %v742, %v741
        %v746 = vsel %vm626, %v729, 0
        %748 = vmatprep.subr.bf16.mxu0 0
        %749 = vmatpush1.bf16.msra.mxu0 %v743
        %750 = vmatprep.subr.bf16.mxu0 0
        %751 = vmatpush1.bf16.msra.mxu0 0
        %752 = vmatprep.subr.bf16.mxu0 0
        %753 = vmatpush1.bf16.msra.mxu0 0
        %754 = vmatprep.subr.bf16.mxu0 0
        %755 = vmatpush1.bf16.msra.mxu0 0
        %756 = vmatprep.subr.bf16.mxu0 0
        %757 = vmatpush1.bf16.msra.mxu0 0
        %758 = vmatprep.subr.bf16.mxu0 0
        %759 = vmatpush1.bf16.msra.mxu0 0
        %760 = vmatprep.subr.bf16.mxu0 0
        %761 = vmatpush1.bf16.msra.mxu0 0
        %762 = vmatprep.subr.bf16.mxu0 0
        %763 = vmatpush1.bf16.msra.mxu0 0
        %764 = vmatprep.subr.bf16.mxu0 0
        %765 = vmatpush1.bf16.msra.mxu0 0
        %766 = vmatprep.subr.bf16.mxu0 0
        %767 = vmatpush1.bf16.msra.mxu0 0
        %768 = vmatprep.subr.bf16.mxu0 0
        %769 = vmatpush1.bf16.msra.mxu0 0
        %770 = vmatprep.subr.bf16.mxu0 0
        %771 = vmatpush1.bf16.msra.mxu0 0
        %772 = vmatprep.subr.bf16.mxu0 0
        %773 = vmatpush1.bf16.msra.mxu0 0
        %774 = vmatprep.subr.bf16.mxu0 0
        %775 = vmatpush1.bf16.msra.mxu0 0
        %776 = vmatprep.subr.bf16.mxu0 0
        %777 = vmatpush1.bf16.msra.mxu0 0
        %778 = vmatprep.subr.bf16.mxu0 0
        %779 = vmatpush1.bf16.msra.mxu0 0
        %780 = vmatprep.mubr.bf16.mxu0 0
        %781 = vmatmul.mubr.bf16.gmra.mrb[0].mxu0 %v746
        %v782 = vpop.f32.mrb[0].mxu0
        %v783 = vadd.f32 %v737, %v782
        %v784 = vpop.f32.mrb[0].mxu0
        %v785 = vpop.f32.mrb[0].mxu0
        %v786 = vpop.f32.mrb[0].mxu0
        %787 = vdwg.mxu0
        %v788 = vpack.c.bf16 %v665, %v665
        %v789 = vpack.c.bf16 %v724, %v724
        %vm790 = vcmask 64512
        %v792 = vsel %vm790, %v788, 0
        %v795 = vsel %vm790, %v789, 0
        %797 = vmatprep.subr.bf16.mxu0 0
        %798 = vmatpush1.bf16.xpose.msra.mxu0 %v795
        %799 = vmatprep.subr.bf16.mxu0 0
        %800 = vmatpush1.bf16.xpose.msra.mxu0 0
        %801 = vmatprep.subr.bf16.mxu0 0
        %802 = vmatpush1.bf16.xpose.msra.mxu0 0
        %803 = vmatprep.subr.bf16.mxu0 0
        %804 = vmatpush1.bf16.xpose.msra.mxu0 0
        %805 = vmatprep.subr.bf16.mxu0 0
        %806 = vmatpush1.bf16.xpose.msra.mxu0 0
        %807 = vmatprep.subr.bf16.mxu0 0
        %808 = vmatpush1.bf16.xpose.msra.mxu0 0
        %809 = vmatprep.subr.bf16.mxu0 0
        %810 = vmatpush1.bf16.xpose.msra.mxu0 0
        %811 = vmatprep.subr.bf16.mxu0 0
        %812 = vmatpush1.bf16.xpose.msra.mxu0 0
        %813 = vmatprep.subr.bf16.mxu0 0
        %814 = vmatpush1.bf16.xpose.msra.mxu0 0
        %815 = vmatprep.subr.bf16.mxu0 0
        %816 = vmatpush1.bf16.xpose.msra.mxu0 0
        %817 = vmatprep.subr.bf16.mxu0 0
        %818 = vmatpush1.bf16.xpose.msra.mxu0 0
        %819 = vmatprep.subr.bf16.mxu0 0
        %820 = vmatpush1.bf16.xpose.msra.mxu0 0
        %821 = vmatprep.subr.bf16.mxu0 0
        %822 = vmatpush1.bf16.xpose.msra.mxu0 0
        %823 = vmatprep.subr.bf16.mxu0 0
        %824 = vmatpush1.bf16.xpose.msra.mxu0 0
        %825 = vmatprep.subr.bf16.mxu0 0
        %826 = vmatpush1.bf16.xpose.msra.mxu0 0
        %827 = vmatprep.subr.bf16.mxu0 0
        %828 = vmatpush1.bf16.xpose.msra.mxu0 0
        %829 = vmatprep.mubr.bf16.mxu0 0
        %830 = vmatmul.mubr.bf16.gmra.mrb[0].mxu0 %v792
        %v831 = vpop.f32.mrb[0].mxu0
        %v832 = vadd.f32 0.0, %v831
        %v833 = vpop.f32.mrb[0].mxu0
        %v834 = vpop.f32.mrb[0].mxu0
        %v835 = vpop.f32.mrb[0].mxu0
        %836 = vdwg.mxu0
        %v837 = vsel %vm790, %v832, -inf
        %838 = vmax.xlane.f32.xlu0 %v837
        %v839 = vpop.xlane.xlu0 %838
        %v840 = vsub.f32 %v832, %v839
        %v841 = vmul.f32 %v840, 1.442695
        %v842 = vpow.pop %v841
        %v843 = vsel %vm790, %v842, 0.0
        %844 = vadd.xlane.f32.xlu0 %v843
        %v845 = vpop.xlane.xlu0 %844
        %v846 = vrcp.pop %v845
        %v847 = vmul.f32 %v842, %v846
        %848 = vst.msk [vmem:[%s565] sm:$0xff] %vm790, %v847
        %v849 = vpack.c.bf16 %v847, %v847
        %v850 = vpack.c.bf16 %v783, %v783
        %v852 = vsel %vm790, %v849, 0
        %vm854 = vcmask 1043456
        %v856 = vsel %vm854, %v850, 0
        %858 = vmatprep.subr.bf16.mxu0 0
        %859 = vmatpush1.bf16.msra.mxu0 %v856
        %860 = vmatprep.subr.bf16.mxu0 0
        %861 = vmatpush1.bf16.msra.mxu0 0
        %862 = vmatprep.subr.bf16.mxu0 0
        %863 = vmatpush1.bf16.msra.mxu0 0
        %864 = vmatprep.subr.bf16.mxu0 0
        %865 = vmatpush1.bf16.msra.mxu0 0
        %866 = vmatprep.subr.bf16.mxu0 0
        %867 = vmatpush1.bf16.msra.mxu0 0
        %868 = vmatprep.subr.bf16.mxu0 0
        %869 = vmatpush1.bf16.msra.mxu0 0
        %870 = vmatprep.subr.bf16.mxu0 0
        %871 = vmatpush1.bf16.msra.mxu0 0
        %872 = vmatprep.subr.bf16.mxu0 0
        %873 = vmatpush1.bf16.msra.mxu0 0
        %874 = vmatprep.subr.bf16.mxu0 0
        %875 = vmatpush1.bf16.msra.mxu0 0
        %876 = vmatprep.subr.bf16.mxu0 0
        %877 = vmatpush1.bf16.msra.mxu0 0
        %878 = vmatprep.subr.bf16.mxu0 0
        %879 = vmatpush1.bf16.msra.mxu0 0
        %880 = vmatprep.subr.bf16.mxu0 0
        %881 = vmatpush1.bf16.msra.mxu0 0
        %882 = vmatprep.subr.bf16.mxu0 0
        %883 = vmatpush1.bf16.msra.mxu0 0
        %884 = vmatprep.subr.bf16.mxu0 0
        %885 = vmatpush1.bf16.msra.mxu0 0
        %886 = vmatprep.subr.bf16.mxu0 0
        %887 = vmatpush1.bf16.msra.mxu0 0
        %888 = vmatprep.subr.bf16.mxu0 0
        %889 = vmatpush1.bf16.msra.mxu0 0
        %890 = vmatprep.mubr.bf16.mxu0 0
        %891 = vmatmul.mubr.bf16.gmra.mrb[0].mxu0 %v852
        %v892 = vpop.f32.mrb[0].mxu0
        %v893 = vadd.f32 0.0, %v892
        %v894 = vpop.f32.mrb[0].mxu0
        %v895 = vpop.f32.mrb[0].mxu0
        %v896 = vpop.f32.mrb[0].mxu0
        %897 = vdwg.mxu0
        %p898 = scmp.eq.s32.totalorder %s37, 0
        // Predicated region
        $region65: #{attention_forward.1} parent=63 // pred_check
          %p899 = pneg %p898
        $region66: #{attention_forward.1} parent=63 // pred_check_branch
          %901 = sbr.rel (%p899) target = $region68
        $region67: #{attention_forward.1} parent=63 // pred_region
          %v902 = vld [vmem:[%s10] sm:$0x1]
          %v904 = vlaneseq
          %v905 = vshrl.u32 %v904, 7
          %v906 = vsub.s32 0, %v905
          %v907 = vrot.slane %v902, %v906
          %vm909 = vcmask 261120
          %910 = vst.msk [vmem:[#allocation2] sm:$0xff] %vm909, %v907
        $region68: #{attention_forward.1} parent=63 // pred_fallthru
          _
        %v911 = vld [vmem:[#allocation2] sm:$0xff]
        %v912 = vpack.c.bf16 %v893, %v893
        %v913 = vld [vmem:[%s608] sm:$0xf]
        %v915 = vsel %vm790, %v912, 0
        %v918 = vsel %vm854, %v913, 0
        %920 = vmatprep.subr.bf16.mxu0 0
        %921 = vmatpush1.bf16.msra.mxu0 %v918
        %922 = vmatprep.subr.bf16.mxu0 0
        %923 = vmatpush1.bf16.msra.mxu0 0
        %924 = vmatprep.subr.bf16.mxu0 0
        %925 = vmatpush1.bf16.msra.mxu0 0
        %926 = vmatprep.subr.bf16.mxu0 0
        %927 = vmatpush1.bf16.msra.mxu0 0
        %928 = vmatprep.subr.bf16.mxu0 0
        %929 = vmatpush1.bf16.msra.mxu0 0
        %930 = vmatprep.subr.bf16.mxu0 0
        %931 = vmatpush1.bf16.msra.mxu0 0
        %932 = vmatprep.subr.bf16.mxu0 0
        %933 = vmatpush1.bf16.msra.mxu0 0
        %934 = vmatprep.subr.bf16.mxu0 0
        %935 = vmatpush1.bf16.msra.mxu0 0
        %936 = vmatprep.subr.bf16.mxu0 0
        %937 = vmatpush1.bf16.msra.mxu0 0
        %938 = vmatprep.subr.bf16.mxu0 0
        %939 = vmatpush1.bf16.msra.mxu0 0
        %940 = vmatprep.subr.bf16.mxu0 0
        %941 = vmatpush1.bf16.msra.mxu0 0
        %942 = vmatprep.subr.bf16.mxu0 0
        %943 = vmatpush1.bf16.msra.mxu0 0
        %944 = vmatprep.subr.bf16.mxu0 0
        %945 = vmatpush1.bf16.msra.mxu0 0
        %946 = vmatprep.subr.bf16.mxu0 0
        %947 = vmatpush1.bf16.msra.mxu0 0
        %948 = vmatprep.subr.bf16.mxu0 0
        %949 = vmatpush1.bf16.msra.mxu0 0
        %950 = vmatprep.subr.bf16.mxu0 0
        %951 = vmatpush1.bf16.msra.mxu0 0
        %952 = vmatprep.mubr.bf16.mxu0 0
        %953 = vmatmul.mubr.bf16.gmra.mrb[0].mxu0 %v915
        %v954 = vpop.f32.mrb[0].mxu0
        %v955 = vadd.f32 0.0, %v954
        %v956 = vpop.f32.mrb[0].mxu0
        %v957 = vpop.f32.mrb[0].mxu0
        %v958 = vpop.f32.mrb[0].mxu0
        %959 = vdwg.mxu0
        %v960 = vadd.f32 %v911, %v955
        %vm961 = vcmask 261120
        %962 = vst.msk [vmem:[#allocation2] sm:$0xff] %vm961, %v960
        %p963 = scmp.eq.s32.totalorder %s37, 3
        // Predicated region
        $region69: #{attention_forward.1} parent=63 // pred_check
          %p964 = pneg %p963
        $region70: #{attention_forward.1} parent=63 // pred_check_branch
          %966 = sbr.rel (%p964) target = $region72
        $region71: #{attention_forward.1} parent=63 // pred_region
          %v967 = vld [vmem:[#allocation2] sm:$0xff]
          %968 = vst.msk [vmem:[%s558] sm:$0xff] %vm961, %v967
        $region72: #{attention_forward.1} parent=63 // pred_fallthru
          _
        %s969 = sand.u32 %s342, 1
        %s970 = scalar_lea.sflag [#allocation4], %s969
        %s971 = sand.u32 %s342, 1
        %s972 = smul.addr %s971, 8
        %s973 = scalar_lea.vmem [#allocation3], %s972
        %s974 = sand.u32 %s372, 1
        %s975 = scalar_lea.sflag [#allocation6], %s974
        %s976 = sand.u32 %s372, 1
        %s977 = smul.addr %s976, 8
        %s978 = scalar_lea.vmem [#allocation5], %s977
        // Predicated region
        $region73: #{attention_forward.1} parent=63 // pred_check
          %p979 = pneg %p352
        $region74: #{attention_forward.1} parent=63 // pred_check_branch
          %981 = sbr.rel (%p979) target = $region76
        $region75: #{attention_forward.1} parent=63 // pred_region
          %s983 = ssub.s32 128, 128
          %984 = vsyncadd %s970, %s983
          %s985 = sadd.s32 %s36, %s35
          %s986 = smul.addr %s985, 128
          %s987 = scalar_lea.hbm %s11, %s986
          %s989 = sshll.u32 %s973, 4
          %s990 = int_to_ptr.vmem [resolvable:$true] %s989
          %992 = dma.vmem_to_hbm [thread:$0]  %s990, 128, %s987, %s970
        $region76: #{attention_forward.1} parent=63 // pred_fallthru
          _
        // Predicated region
        $region77: #{attention_forward.1} parent=63 // pred_check
          %p993 = pneg %p382
        $region78: #{attention_forward.1} parent=63 // pred_check_branch
          %995 = sbr.rel (%p993) target = $region80
        $region79: #{attention_forward.1} parent=63 // pred_region
          %s997 = ssub.s32 128, 128
          %998 = vsyncadd %s975, %s997
          %s999 = sadd.s32 %s36, %s37
          %s1000 = smul.addr %s35, 4
          %s1001 = sadd.s32 %s999, %s1000
          %s1002 = smul.addr %s1001, 128
          %s1003 = scalar_lea.hbm %s12, %s1002
          %s1005 = sshll.u32 %s978, 4
          %s1006 = int_to_ptr.vmem [resolvable:$true] %s1005
          %1008 = dma.vmem_to_hbm [thread:$0]  %s1006, 128, %s1003, %s975
        $region80: #{attention_forward.1} parent=63 // pred_fallthru
          _
      $region64: #{attention_forward.1} parent=5 // pred_fallthru
        _
      %p1009 = scmp.le.s32.totalorder 2, %s25
      // Predicated region
      $region81: #{attention_forward.1} parent=5 // pred_check
        %p1010 = pneg %p1009
      $region82: #{attention_forward.1} parent=5 // pred_check_branch
        %1012 = sbr.rel (%p1010) target = $region84
      $region83: #{attention_forward.1} parent=5 // pred_region
        %s1013 = ssub.s32 %s25, 2
        // Predicated region
        $region85: #{attention_forward.1} parent=83 // pred_check
          %p1014 = pneg %p358
        $region86: #{attention_forward.1} parent=83 // pred_check_branch
          %1016 = sbr.rel (%p1014) target = $region88
        $region87: #{attention_forward.1} parent=83 // pred_region
          %s1017 = sand.u32 %s343, 1
          %s1018 = scalar_lea.sflag [#allocation4], %s1017
          %s1019 = sand.u32 %s343, 1
          %s1020 = smul.addr %s1019, 8
          %s1021 = scalar_lea.vmem [#allocation3], %s1020
          %1022 = dma.done %s1018, 128
        $region88: #{attention_forward.1} parent=83 // pred_fallthru
          _
        // Predicated region
        $region89: #{attention_forward.1} parent=83 // pred_check
          %p1023 = pneg %p388
        $region90: #{attention_forward.1} parent=83 // pred_check_branch
          %1025 = sbr.rel (%p1023) target = $region92
        $region91: #{attention_forward.1} parent=83 // pred_region
          %s1026 = sand.u32 %s373, 1
          %s1027 = scalar_lea.sflag [#allocation6], %s1026
          %s1028 = sand.u32 %s373, 1
          %s1029 = smul.addr %s1028, 8
          %s1030 = scalar_lea.vmem [#allocation5], %s1029
          %1031 = dma.done %s1027, 128
        $region92: #{attention_forward.1} parent=83 // pred_fallthru
          _
      $region84: #{attention_forward.1} parent=5 // pred_fallthru
        _
    $region6: #{attention_forward.1} parent=1 // loop_footer
      %s29 = sadd.s32 1, %s25
    $region7: #{attention_forward.1} parent=1 // loop_footer_branch
      %24 = sbr.rel target = $region3
    $region8: #{attention_forward.1} parent=1 // loop_exit
      _
    %1032 = vsyncpa [#allocation4], 1
    %s1033 = scalar_lea.sflag [#allocation4], 1
    %1034 = vsyncpa %s1033, 1
    %1035 = vsyncpa [#allocation6], 1
    %s1036 = scalar_lea.sflag [#allocation6], 1
    %1037 = vsyncpa %s1036, 1

</llo_original>
